<compile_context>
chip_gen: v6e
topology: v6e:2x2x1
jax: 0.10.0
libtpu: 0.0.40
codegen_flags: <defaults>
</compile_context>

<pallas_src>
import functools

import jax
import jax.numpy as jnp
from jax.experimental import pallas as pl
from jax.experimental.pallas import tpu as pltpu


def _stacked_linear_kernel(x_ref, w_ref, *rest, has_bias):
    # x_ref: (G, B, TK)   w_ref: (G, TK, F)   [b_ref: (G, 1, F)]
    # o_ref: (G, B, F)    acc_ref: (G, B, F) f32 scratch (resident across k)
    if has_bias:
        b_ref, o_ref, acc_ref = rest
    else:
        b_ref = None
        o_ref, acc_ref = rest

    k = pl.program_id(1)

    @pl.when(k == 0)
    def _():
        acc_ref[...] = jnp.zeros_like(acc_ref)

    # Batched contraction over K. Weights are already K-major, so the MXU is
    # fed directly (output F lands on lanes) with no cross-lane shuffle.
    acc_ref[...] += jax.lax.dot_general(
        x_ref[...],
        w_ref[...],
        dimension_numbers=(((2,), (1,)), ((0,), (0,))),
        preferred_element_type=jnp.float32,
    )

    @pl.when(k == pl.num_programs(1) - 1)
    def _():
        out = acc_ref[...]
        if has_bias:
            out = out + b_ref[...].astype(jnp.float32)  # (G,1,F) broadcasts over B
        o_ref[...] = out.astype(o_ref.dtype)


def _choose_nets_per_step(n_nets, per_net_bytes, budget_bytes):
    """Largest divisor of n_nets fitting the VMEM budget; prefer >=2 grid steps."""
    g_best = 1
    for g in range(1, n_nets + 1):
        if n_nets % g == 0 and g * per_net_bytes <= budget_bytes:
            g_best = g
    if n_nets // g_best < 2:
        # Keep at least 2 steps on the "parallel" axis so both v7x TensorCores
        # can be used (and the pipeline has something to overlap).
        smaller = [g for g in range(1, g_best) if n_nets % g == 0]
        if smaller:
            g_best = smaller[-1]
    return g_best


def stacked_linear(x, weight, bias=None, *, vmem_limit_bytes=48 * 1024 * 1024):
    """Pallas forward of StackedLinear.

    x:      (N, B, K)
    weight: (N, F, K)   (PyTorch nn.Linear layout, stacked)
    bias:   (N, 1, F) or None
    returns (N, B, F)
    """
    N, B, K = x.shape
    Nw, F, Kw = weight.shape
    assert N == Nw and K == Kw
    if bias is not None:
        assert bias.shape == (N, 1, F)

    # Pre-transpose once in the wrapper: (N, F, K) -> (N, K, F).  This removes
    # the per-grid-step transpose from the kernel entirely.
    w_t = jnp.swapaxes(weight, 1, 2)

    # ---- K (reduction) tiling ------------------------------------------------
    if K <= 2048:
        tk = K                      # small K: single block, no reduction loop
    else:
        tk = 512                    # large K: bounded working set, f32 accum
    kp = pl.cdiv(K, tk) * tk
    if kp != K:                     # zero-pad K (zeros contribute nothing)
        x = jnp.pad(x, ((0, 0), (0, 0), (0, kp - K)))
        w_t = jnp.pad(w_t, ((0, 0), (0, kp - K), (0, 0)))
    nk = kp // tk

    # ---- nets per grid step (G), budgeted against scoped VMEM ----------------
    x_b = jnp.dtype(x.dtype).itemsize
    w_b = jnp.dtype(w_t.dtype).itemsize
    b_b = jnp.dtype(bias.dtype).itemsize if bias is not None else 0
    # double-buffered inputs/outputs + resident f32 accumulator, per net
    per_net = (2 * (B * tk * x_b + tk * F * w_b + B * F * x_b + F * b_b)
               + B * F * 4)
    budget = int(vmem_limit_bytes * 0.7)
    G = _choose_nets_per_step(N, per_net, budget)
    grid = (N // G, nk)

    x_spec = pl.BlockSpec((G, B, tk), lambda n, k: (n, 0, k))
    w_spec = pl.BlockSpec((G, tk, F), lambda n, k: (n, k, 0))
    o_spec = pl.BlockSpec((G, B, F), lambda n, k: (n, 0, 0))
    scratch = [pltpu.VMEM((G, B, F), jnp.float32)]

    compiler_params = pltpu.CompilerParams(
        dimension_semantics=("parallel", "arbitrary"),
        vmem_limit_bytes=vmem_limit_bytes,
    )
    out_shape = jax.ShapeDtypeStruct((N, B, F), x.dtype)

    if bias is not None:
        b_spec = pl.BlockSpec((G, 1, F), lambda n, k: (n, 0, 0))
        return pl.pallas_call(
            functools.partial(_stacked_linear_kernel, has_bias=True),
            out_shape=out_shape,
            grid_spec=pltpu.PrefetchScalarGridSpec(
                num_scalar_prefetch=0,
                grid=grid,
                in_specs=[x_spec, w_spec, b_spec],
                out_specs=o_spec,
                scratch_shapes=scratch,
            ),
            compiler_params=compiler_params,
        )(x, w_t, bias)
    else:
        return pl.pallas_call(
            functools.partial(_stacked_linear_kernel, has_bias=False),
            out_shape=out_shape,
            grid_spec=pltpu.PrefetchScalarGridSpec(
                num_scalar_prefetch=0,
                grid=grid,
                in_specs=[x_spec, w_spec],
                out_specs=o_spec,
                scratch_shapes=scratch,
            ),
            compiler_params=compiler_params,
        )(x, w_t)


if __name__ == "__main__":
    # Small, deterministic setup: stack of 3 Linear(in=32, out=16), batch=8.
    num_nets, batch, in_features, out_features = 3, 8, 32, 16

    key = jax.random.PRNGKey(0)
    kx, kw, kb = jax.random.split(key, 3)

    x = jax.random.normal(kx, (num_nets, batch, in_features), dtype=jnp.float32)
    weight = jax.random.normal(
        kw, (num_nets, out_features, in_features), dtype=jnp.float32) * 0.1
    bias = jax.random.normal(
        kb, (num_nets, 1, out_features), dtype=jnp.float32) * 0.1

    # With bias.
    out = jax.block_until_ready(stacked_linear(x, weight, bias))
    ref = jnp.einsum("nbk,nfk->nbf", x, weight) + bias
    assert out.shape == (num_nets, batch, out_features)
    assert jnp.allclose(out, ref, atol=1e-5, rtol=1e-5)

    # Without bias (StackedLinear supports bias=None).
    out_nb = jax.block_until_ready(stacked_linear(x, weight, None))
    ref_nb = jnp.einsum("nbk,nfk->nbf", x, weight)
    assert jnp.allclose(out_nb, ref_nb, atol=1e-5, rtol=1e-5)

    print("KERNEL_OK")
</pallas_src>

<mosaic_0001>
module attributes {stable_mosaic.version = 11 : i64} {
  func.func @_stacked_linear_kernel(%arg0: i32, %arg1: i32, %arg2: memref<1x8x32xf32, #tpu.memory_space<vmem>>, %arg3: memref<1x32x16xf32, #tpu.memory_space<vmem>>, %arg4: memref<1x1x16xf32, #tpu.memory_space<vmem>>, %arg5: memref<1x8x16xf32, #tpu.memory_space<vmem>>, %arg6: memref<1x8x16xf32, #tpu.memory_space<vmem>>) attributes {dimension_semantics = [#tpu.dimension_semantics<parallel>, #tpu.dimension_semantics<arbitrary>], iteration_bounds = array<i64: 3, 1>, scalar_prefetch = 0 : i64, scratch_operands = 1 : i64, tpu.core_type = #tpu.core_type<tc>, window_params = [{transform_indices = @transform_0, window_bounds = array<i64: 1, 8, 32>}, {transform_indices = @transform_1, window_bounds = array<i64: 1, 32, 16>}, {transform_indices = @transform_2, window_bounds = array<i64: 1, 1, 16>}, {transform_indices = @transform_3, window_bounds = array<i64: 1, 8, 16>}]} {
    %c0_i32 = arith.constant 0 : i32
    %0 = arith.cmpi eq, %arg1, %c0_i32 : i32
    %1 = arith.extui %0 : i1 to i32
    %c0_i32_0 = arith.constant 0 : i32
    %2 = arith.cmpi ne, %1, %c0_i32_0 : i32
    scf.if %2 {
      %cst_14 = arith.constant 0.000000e+00 : f32
      %12 = vector.broadcast %cst_14 : f32 to vector<1x8x16xf32>
      %c0_15 = arith.constant 0 : index
      %c0_16 = arith.constant 0 : index
      %c0_17 = arith.constant 0 : index
      %13 = vector.load %arg6[%c0_15, %c0_16, %c0_17] : memref<1x8x16xf32, #tpu.memory_space<vmem>>, vector<1x8x16xf32>
      tpu.vector_store %arg6[%c0_15, %c0_16, %c0_17], %12 {strides = array<i32>} : memref<1x8x16xf32, #tpu.memory_space<vmem>>, vector<1x8x16xf32>,
    } else {
    }
    %c0 = arith.constant 0 : index
    %c0_1 = arith.constant 0 : index
    %c0_2 = arith.constant 0 : index
    %3 = vector.load %arg6[%c0, %c0_1, %c0_2] : memref<1x8x16xf32, #tpu.memory_space<vmem>>, vector<1x8x16xf32>
    %c0_3 = arith.constant 0 : index
    %c0_4 = arith.constant 0 : index
    %c0_5 = arith.constant 0 : index
    %4 = vector.load %arg2[%c0_3, %c0_4, %c0_5] : memref<1x8x32xf32, #tpu.memory_space<vmem>>, vector<1x8x32xf32>
    %c0_6 = arith.constant 0 : index
    %c0_7 = arith.constant 0 : index
    %c0_8 = arith.constant 0 : index
    %5 = vector.load %arg3[%c0_6, %c0_7, %c0_8] : memref<1x32x16xf32, #tpu.memory_space<vmem>>, vector<1x32x16xf32>
    %cst = arith.constant dense<0.000000e+00> : vector<1x8x16xf32>
    %6 = tpu.matmul %4, %5, %cst {dimension_numbers = #tpu.dot_dimension_numbers<[2], [1], [1], [2], [0, 0, 0, 1, 1, 2], [0], [0]>} : vector<1x8x32xf32>, vector<1x32x16xf32>, vector<1x8x16xf32> -> vector<1x8x16xf32>
    %7 = arith.addf %3, %6 : vector<1x8x16xf32>
    %c0_9 = arith.constant 0 : index
    %c0_10 = arith.constant 0 : index
    %c0_11 = arith.constant 0 : index
    %8 = vector.load %arg6[%c0_9, %c0_10, %c0_11] : memref<1x8x16xf32, #tpu.memory_space<vmem>>, vector<1x8x16xf32>
    tpu.vector_store %arg6[%c0_9, %c0_10, %c0_11], %7 {strides = array<i32>} : memref<1x8x16xf32, #tpu.memory_space<vmem>>, vector<1x8x16xf32>,
    %c0_i32_12 = arith.constant 0 : i32
    %9 = arith.cmpi eq, %arg1, %c0_i32_12 : i32
    %10 = arith.extui %9 : i1 to i32
    %c0_i32_13 = arith.constant 0 : i32
    %11 = arith.cmpi ne, %10, %c0_i32_13 : i32
    scf.if %11 {
      %c0_14 = arith.constant 0 : index
      %c0_15 = arith.constant 0 : index
      %c0_16 = arith.constant 0 : index
      %12 = vector.load %arg6[%c0_14, %c0_15, %c0_16] : memref<1x8x16xf32, #tpu.memory_space<vmem>>, vector<1x8x16xf32>
      %c0_17 = arith.constant 0 : index
      %c0_18 = arith.constant 0 : index
      %c0_19 = arith.constant 0 : index
      %13 = vector.load %arg4[%c0_17, %c0_18, %c0_19] : memref<1x1x16xf32, #tpu.memory_space<vmem>>, vector<1x1x16xf32>
      %14 = vector.broadcast %13 : vector<1x1x16xf32> to vector<1x8x16xf32>
      %15 = arith.addf %12, %14 : vector<1x8x16xf32>
      %c0_20 = arith.constant 0 : index
      %c0_21 = arith.constant 0 : index
      %c0_22 = arith.constant 0 : index
      %16 = vector.load %arg5[%c0_20, %c0_21, %c0_22] : memref<1x8x16xf32, #tpu.memory_space<vmem>>, vector<1x8x16xf32>
      tpu.vector_store %arg5[%c0_20, %c0_21, %c0_22], %15 {strides = array<i32>} : memref<1x8x16xf32, #tpu.memory_space<vmem>>, vector<1x8x16xf32>,
    } else {
    }
    return
  }
  func.func @transform_0(%arg0: i32, %arg1: i32) -> (i32, i32, i32) {
    %c0_i32 = arith.constant 0 : i32
    %c0_i32_0 = arith.constant 0 : i32
    return %arg0, %c0_i32, %arg1 : i32, i32, i32
  }
  func.func @transform_1(%arg0: i32, %arg1: i32) -> (i32, i32, i32) {
    %c0_i32 = arith.constant 0 : i32
    %c0_i32_0 = arith.constant 0 : i32
    return %arg0, %arg1, %c0_i32 : i32, i32, i32
  }
  func.func @transform_2(%arg0: i32, %arg1: i32) -> (i32, i32, i32) {
    %c0_i32 = arith.constant 0 : i32
    %c0_i32_0 = arith.constant 0 : i32
    %c0_i32_1 = arith.constant 0 : i32
    return %arg0, %c0_i32, %c0_i32_0 : i32, i32, i32
  }
  func.func @transform_3(%arg0: i32, %arg1: i32) -> (i32, i32, i32) {
    %c0_i32 = arith.constant 0 : i32
    %c0_i32_0 = arith.constant 0 : i32
    %c0_i32_1 = arith.constant 0 : i32
    return %arg0, %c0_i32, %c0_i32_0 : i32, i32, i32
  }
}

</mosaic_0001>

<llo_original>
// kernel: tpu_custom_call.1
$region0: #{tpu_custom_call.1}
  #allocation0 [shape = 'u32[]', space=smem, size = 0x4, offset = 0x4, fixed_abs, tag = 'smem constant byte address 0x4 - core index']
  #allocation1 [shape = 'u32[144,128]{1,0:T(1,128)}', space=vmem, size = 0x12000, scoped, tag = 'internal scratch']
  #allocation2 [shape = 'f32[1,8,16]{2,1,0:T(8,128)}', space=vmem, size = 0x1000, scoped, tag = 'scratch operand']
  %s0 = inlined_call_operand.vmem [shape: f32[3,8,32], index: 0, kind: input, shape index: {}]
  %s1 = inlined_call_operand.vmem [shape: f32[3,32,16], index: 1, kind: input, shape index: {}]
  %s2 = inlined_call_operand.vmem [shape: f32[3,1,16], index: 2, kind: input, shape index: {}]
  %s3 = inlined_call_operand.hbm [shape: f32[3,8,16], index: 3, kind: output, shape index: {}]
  %s4 = sld [smem:[#allocation0]]
  $region53: #{tpu_custom_call.1} parent=0
    _
  %s6 = ssub.s32 1, %s4
  %s7 = scalar_select 0, %s6, %s4
  $region1: #{tpu_custom_call.1} parent=0
    #allocation3 [shape = 'u8[8192]{0}', space=vmem, size = 0x2000, scoped, tag = 'output window, operand 0']
    #allocation4 [shape = 's32[2]{0}', space=sflag, size = 0x8, scoped, tag = 'scoped memory for tpu_custom_call.1']
    %8 = vsyncpa [#allocation4], 0
    %s9 = scalar_lea.sflag [#allocation4], 1
    %10 = vsyncpa %s9, 0
    loop: start=0, step=1, limit=5
    $region2: #{tpu_custom_call.1} parent=1 // loop_pre_header
      _
    $region3: #{tpu_custom_call.1} parent=1 // loop_header
      %s12 = sphi 0, %s16
      %p13 = scmp.ge.s32.totalorder %s12, 5
      %s19 = sphi 0, %s31
      %s20 = sphi 0, %s27
      %s21 = sphi 0, %s19
      %s22 = sphi 0, %s20
      %s23 = sphi 0, %s21
      %s24 = sphi 0, %s22
      %s36 = sphi 0, %s38
      %s39 = sphi 0, %s36
      %s40 = sphi 0, %s39
      %s56 = sphi 0, %s40
      %s64 = sphi 0, %s66
      %s67 = sphi 0, %s64
      %s68 = sphi 0, %s67
      %s84 = sphi 0, %s68
      %s90 = sphi 0, %s92
      %s93 = sphi 0, %s90
      %s94 = sphi 0, %s93
      %s110 = sphi 0, %s94
      %s116 = sphi 0, %s118
      %s119 = sphi 0, %s116
      %s120 = sphi 0, %s119
      %s136 = sphi 0, %s120
    $region4: #{tpu_custom_call.1} parent=1 // loop_header_branch
      %15 = sbr.rel (%p13) target = $region8
    $region5: #{tpu_custom_call.1} parent=1 // loop_body
      %s17 = ssub.s32 %s12, 1
      %s18 = ssub.s32 %s12, 2
      %s25 = sadd.s32 1, %s20
      %p26 = scmp.ge.s32.totalorder %s25, 1
      %s27 = scalar_select %p26, 0, %s25
      %s28 = sadd.s32 1, %s19
      %s29 = scalar_select %p26, %s28, %s19
      %p30 = scmp.ge.s32.totalorder %s29, 3
      %s31 = scalar_select %p30, 0, %s29
      %s32 = ssub.s32 %s19, %s31
      %s33 = ssub.s32 %s20, %s27
      %s34 = sor.u32 %s32, %s33
      %p35 = scmp.eq.s32.totalorder %s34, 0
      %s37 = sadd.s32 %s36, 1
      %s38 = scalar_select %p35, %s36, %s37
      %p41 = pneg %p35
      %p42 = scmp.eq.s32.totalorder %s12, 2
      %p43 = por %p41, %p42
      %p44 = scmp.ne.s32.totalorder %s36, %s39
      %p45 = scmp.eq.s32.totalorder %s12, 0
      %p46 = por %p44, %p45
      %p47 = scmp.ne.s32.totalorder %s36, %s39
      %p48 = scmp.eq.s32.totalorder %s17, 2
      %p49 = por %p47, %p48
      %p50 = scmp.ne.s32.totalorder %s39, %s40
      %p51 = scmp.eq.s32.totalorder %s17, 0
      %p52 = por %p50, %p51
      %p53 = scmp.ne.s32.totalorder %s39, %s40
      %p54 = scmp.eq.s32.totalorder %s18, 2
      %p55 = por %p53, %p54
      %p57 = scmp.ne.s32.totalorder %s40, %s56
      %p58 = scmp.eq.s32.totalorder %s18, 0
      %p59 = por %p57, %p58
      %s60 = ssub.s32 %s19, %s31
      %s61 = ssub.s32 %s20, %s27
      %s62 = sor.u32 %s60, %s61
      %p63 = scmp.eq.s32.totalorder %s62, 0
      %s65 = sadd.s32 %s64, 1
      %s66 = scalar_select %p63, %s64, %s65
      %p69 = pneg %p63
      %p70 = scmp.eq.s32.totalorder %s12, 2
      %p71 = por %p69, %p70
      %p72 = scmp.ne.s32.totalorder %s64, %s67
      %p73 = scmp.eq.s32.totalorder %s12, 0
      %p74 = por %p72, %p73
      %p75 = scmp.ne.s32.totalorder %s64, %s67
      %p76 = scmp.eq.s32.totalorder %s17, 2
      %p77 = por %p75, %p76
      %p78 = scmp.ne.s32.totalorder %s67, %s68
      %p79 = scmp.eq.s32.totalorder %s17, 0
      %p80 = por %p78, %p79
      %p81 = scmp.ne.s32.totalorder %s67, %s68
      %p82 = scmp.eq.s32.totalorder %s18, 2
      %p83 = por %p81, %p82
      %p85 = scmp.ne.s32.totalorder %s68, %s84
      %p86 = scmp.eq.s32.totalorder %s18, 0
      %p87 = por %p85, %p86
      %s88 = ssub.s32 %s19, %s31
      %p89 = scmp.eq.s32.totalorder %s88, 0
      %s91 = sadd.s32 %s90, 1
      %s92 = scalar_select %p89, %s90, %s91
      %p95 = pneg %p89
      %p96 = scmp.eq.s32.totalorder %s12, 2
      %p97 = por %p95, %p96
      %p98 = scmp.ne.s32.totalorder %s90, %s93
      %p99 = scmp.eq.s32.totalorder %s12, 0
      %p100 = por %p98, %p99
      %p101 = scmp.ne.s32.totalorder %s90, %s93
      %p102 = scmp.eq.s32.totalorder %s17, 2
      %p103 = por %p101, %p102
      %p104 = scmp.ne.s32.totalorder %s93, %s94
      %p105 = scmp.eq.s32.totalorder %s17, 0
      %p106 = por %p104, %p105
      %p107 = scmp.ne.s32.totalorder %s93, %s94
      %p108 = scmp.eq.s32.totalorder %s18, 2
      %p109 = por %p107, %p108
      %p111 = scmp.ne.s32.totalorder %s94, %s110
      %p112 = scmp.eq.s32.totalorder %s18, 0
      %p113 = por %p111, %p112
      %s114 = ssub.s32 %s19, %s31
      %p115 = scmp.eq.s32.totalorder %s114, 0
      %s117 = sadd.s32 %s116, 1
      %s118 = scalar_select %p115, %s116, %s117
      %p121 = pneg %p115
      %p122 = scmp.eq.s32.totalorder %s12, 2
      %p123 = por %p121, %p122
      %p124 = scmp.ne.s32.totalorder %s116, %s119
      %p125 = scmp.eq.s32.totalorder %s12, 0
      %p126 = por %p124, %p125
      %p127 = scmp.ne.s32.totalorder %s116, %s119
      %p128 = scmp.eq.s32.totalorder %s17, 2
      %p129 = por %p127, %p128
      %p130 = scmp.ne.s32.totalorder %s119, %s120
      %p131 = scmp.eq.s32.totalorder %s17, 0
      %p132 = por %p130, %p131
      %p133 = scmp.ne.s32.totalorder %s119, %s120
      %p134 = scmp.eq.s32.totalorder %s18, 2
      %p135 = por %p133, %p134
      %p137 = scmp.ne.s32.totalorder %s120, %s136
      %p138 = scmp.eq.s32.totalorder %s18, 0
      %p139 = por %p137, %p138
      %p140 = scmp.le.s32.totalorder 1, %s12
      %p141 = scmp.lt.s32.totalorder %s12, 4
      %p142 = pnand %p140, %p141
      %p143 = pneg %p142
      // Predicated region
      $region9: #{tpu_custom_call.1} parent=5 // pred_check
        _
      $region10: #{tpu_custom_call.1} parent=5 // pred_check_branch
        %145 = sbr.rel (%p142) target = $region12
      $region11: #{tpu_custom_call.1} parent=5 // pred_region
        %s146 = ssub.s32 %s12, 1
      $region12: #{tpu_custom_call.1} parent=5 // pred_fallthru
        _
      %p147 = scmp.lt.s32.totalorder %s12, 3
      // Predicated region
      $region13: #{tpu_custom_call.1} parent=5 // pred_check
        %p148 = pneg %p147
      $region14: #{tpu_custom_call.1} parent=5 // pred_check_branch
        %150 = sbr.rel (%p148) target = $region16
      $region15: #{tpu_custom_call.1} parent=5 // pred_region
        // Predicated region
        $region17: #{tpu_custom_call.1} parent=15 // pred_check
          %p151 = pneg %p46
        $region18: #{tpu_custom_call.1} parent=15 // pred_check_branch
          %153 = sbr.rel (%p151) target = $region20
        $region19: #{tpu_custom_call.1} parent=15 // pred_region
          %p154 = scmp.lt.s32.totalorder %s19, 2
          %s155 = scalar_select %p154, %s19, 2
          %p156 = scmp.lt.s32.totalorder %s20, 0
          %s157 = scalar_select %p156, %s20, 0
          %s158 = sadd.s32 %s157, %s155
          %s159 = smul.addr %s158, 8
          %s160 = scalar_lea.vmem %s0, %s159
        $region20: #{tpu_custom_call.1} parent=15 // pred_fallthru
          _
        // Predicated region
        $region21: #{tpu_custom_call.1} parent=15 // pred_check
          %p161 = pneg %p74
        $region22: #{tpu_custom_call.1} parent=15 // pred_check_branch
          %163 = sbr.rel (%p161) target = $region24
        $region23: #{tpu_custom_call.1} parent=15 // pred_region
          %s164 = smul.u32 4, %s20
          %p165 = scmp.lt.s32.totalorder %s19, 2
          %s166 = scalar_select %p165, %s19, 2
          %p167 = scmp.lt.s32.totalorder %s164, 3
          %s168 = scalar_select %p167, %s164, 3
          %s169 = smul.addr %s166, 4
          %s170 = sadd.s32 %s168, %s169
          %s171 = smul.addr %s170, 8
          %s172 = scalar_lea.vmem %s1, %s171
          %s173 = smul.u32 4, %s20
        $region24: #{tpu_custom_call.1} parent=15 // pred_fallthru
          _
        // Predicated region
        $region25: #{tpu_custom_call.1} parent=15 // pred_check
          %p174 = pneg %p100
        $region26: #{tpu_custom_call.1} parent=15 // pred_check_branch
          %176 = sbr.rel (%p174) target = $region28
        $region27: #{tpu_custom_call.1} parent=15 // pred_region
          %p177 = scmp.lt.s32.totalorder %s19, 2
          %s178 = scalar_select %p177, %s19, 2
          %s179 = scalar_lea.vmem %s2, %s178
        $region28: #{tpu_custom_call.1} parent=15 // pred_fallthru
          _
      $region16: #{tpu_custom_call.1} parent=5 // pred_fallthru
        _
      %p180 = scmp.le.s32.totalorder 1, %s12
      %p181 = scmp.lt.s32.totalorder %s12, 4
      %p182 = pnand %p180, %p181
      %p183 = pneg %p182
      // Predicated region
      $region29: #{tpu_custom_call.1} parent=5 // pred_check
        _
      $region30: #{tpu_custom_call.1} parent=5 // pred_check_branch
        %185 = sbr.rel (%p182) target = $region32
      $region31: #{tpu_custom_call.1} parent=5 // pred_region
        %s186 = ssub.s32 %s12, 1
        %p187 = scmp.lt.s32.totalorder %s21, 2
        %s188 = scalar_select %p187, %s21, 2
        %p189 = scmp.lt.s32.totalorder %s22, 0
        %s190 = scalar_select %p189, %s22, 0
        %s191 = sadd.s32 %s190, %s188
        %s192 = smul.addr %s191, 8
        %s193 = scalar_lea.vmem %s0, %s192
        %p194 = pneg %p52
        %p195 = pneg %p49
        %s196 = smul.u32 4, %s22
        %p197 = scmp.lt.s32.totalorder %s21, 2
        %s198 = scalar_select %p197, %s21, 2
        %p199 = scmp.lt.s32.totalorder %s196, 3
        %s200 = scalar_select %p199, %s196, 3
        %s201 = smul.addr %s198, 4
        %s202 = sadd.s32 %s200, %s201
        %s203 = smul.addr %s202, 8
        %s204 = scalar_lea.vmem %s1, %s203
        %p205 = pneg %p80
        %p206 = pneg %p77
        %p207 = scmp.lt.s32.totalorder %s21, 2
        %s208 = scalar_select %p207, %s21, 2
        %s209 = scalar_lea.vmem %s2, %s208
        %p210 = pneg %p106
        %p211 = pneg %p103
        %p212 = pneg %p132
        %p213 = pneg %p129
        %s214 = sand.u32 %s119, 1
        %s215 = scalar_lea.sflag [#allocation4], %s214
        %s216 = sand.u32 %s119, 1
        %s217 = smul.addr %s216, 8
        %s218 = scalar_lea.vmem [#allocation3], %s217
        %p219 = scmp.lt.s32.totalorder %s21, 2
        %s220 = scalar_select %p219, %s21, 2
        %p221 = scmp.lt.s32.totalorder %s22, 0
        %s222 = scalar_select %p221, %s22, 0
        %s223 = sadd.s32 %s222, %s220
        %s224 = smul.addr %s223, 8
        %s225 = scalar_lea.vmem %s0, %s224
        %s226 = smul.u32 4, %s22
        %p227 = scmp.lt.s32.totalorder %s21, 2
        %s228 = scalar_select %p227, %s21, 2
        %p229 = scmp.lt.s32.totalorder %s226, 3
        %s230 = scalar_select %p229, %s226, 3
        %s231 = smul.addr %s228, 4
        %s232 = sadd.s32 %s230, %s231
        %s233 = smul.addr %s232, 8
        %s234 = scalar_lea.vmem %s1, %s233
        %s235 = smul.u32 4, %s22
        %p236 = scmp.lt.s32.totalorder %s21, 2
        %s237 = scalar_select %p236, %s21, 2
        %s238 = scalar_lea.vmem %s2, %s237
        %p239 = scmp.eq.s32.totalorder %s22, 0
        // Predicated region
        $region33: #{tpu_custom_call.1} parent=31 // pred_check
          %p240 = pneg %p239
        $region34: #{tpu_custom_call.1} parent=31 // pred_check_branch
          %242 = sbr.rel (%p240) target = $region36
        $region35: #{tpu_custom_call.1} parent=31 // pred_region
          %vm243 = vcmask 130048
          %244 = vst.msk [vmem:[#allocation2] sm:$0xff] %vm243, 0.0
        $region36: #{tpu_custom_call.1} parent=31 // pred_fallthru
          _
        %v245 = vld [vmem:[#allocation2] sm:$0xff]
        %v246 = vld [vmem:[%s225] sm:$0xff]
        %v247 = vld [vmem:[%s234] sm:$0xff]
        %v248 = vld [vmem:[%s234 + $0x8] sm:$0xff]
        %v249 = vld [vmem:[%s234 + $0x10] sm:$0xff]
        %v250 = vld [vmem:[%s234 + $0x18] sm:$0xff]
        %vm251 = vcmask 261120
        %v253 = vsel %vm251, %v246, 0
        %255 = vmatprep.subr.mxu0 0.0
        %256 = vmatpush1.msra.mxu0 0.0
        %257 = vmatprep.subr.mxu0 0.0
        %258 = vmatpush1.msra.mxu0 0.0
        %259 = vmatprep.subr.mxu0 0.0
        %260 = vmatpush1.msra.mxu0 0.0
        %261 = vmatprep.subr.mxu0 0.0
        %262 = vmatpush1.msra.mxu0 0.0
        %263 = vmatprep.subr.mxu0 0.0
        %264 = vmatpush1.msra.mxu0 0.0
        %265 = vmatprep.subr.mxu0 0.0
        %266 = vmatpush1.msra.mxu0 0.0
        %267 = vmatprep.subr.mxu0 0.0
        %268 = vmatpush1.msra.mxu0 0.0
        %269 = vmatprep.subr.mxu0 0.0
        %270 = vmatpush1.msra.mxu0 0.0
        %271 = vmatprep.subr.mxu0 0.0
        %272 = vmatpush1.msra.mxu0 0.0
        %273 = vmatprep.subr.mxu0 0.0
        %274 = vmatpush1.msra.mxu0 0.0
        %275 = vmatprep.subr.mxu0 0.0
        %276 = vmatpush1.msra.mxu0 0.0
        %277 = vmatprep.subr.mxu0 0.0
        %278 = vmatpush1.msra.mxu0 0.0
        %279 = vmatprep.subr.mxu0 0.0
        %280 = vmatpush1.msra.mxu0 %v250
        %281 = vmatprep.subr.mxu0 0.0
        %282 = vmatpush1.msra.mxu0 %v249
        %283 = vmatprep.subr.mxu0 0.0
        %284 = vmatpush1.msra.mxu0 %v248
        %285 = vmatprep.subr.mxu0 0.0
        %286 = vmatpush1.msra.mxu0 %v247
        %287 = vmatprep.subr.mxu0 0.0
        %288 = vmatpush2.msra.mxu0 0.0
        %289 = vmatprep.subr.mxu0 0.0
        %290 = vmatpush2.msra.mxu0 0.0
        %291 = vmatprep.subr.mxu0 0.0
        %292 = vmatpush2.msra.mxu0 0.0
        %293 = vmatprep.subr.mxu0 0.0
        %294 = vmatpush2.msra.mxu0 0.0
        %295 = vmatprep.subr.mxu0 0.0
        %296 = vmatpush2.msra.mxu0 0.0
        %297 = vmatprep.subr.mxu0 0.0
        %298 = vmatpush2.msra.mxu0 0.0
        %299 = vmatprep.subr.mxu0 0.0
        %300 = vmatpush2.msra.mxu0 0.0
        %301 = vmatprep.subr.mxu0 0.0
        %302 = vmatpush2.msra.mxu0 0.0
        %303 = vmatprep.subr.mxu0 0.0
        %304 = vmatpush2.msra.mxu0 0.0
        %305 = vmatprep.subr.mxu0 0.0
        %306 = vmatpush2.msra.mxu0 0.0
        %307 = vmatprep.subr.mxu0 0.0
        %308 = vmatpush2.msra.mxu0 0.0
        %309 = vmatprep.subr.mxu0 0.0
        %310 = vmatpush2.msra.mxu0 0.0
        %311 = vmatprep.subr.mxu0 0.0
        %312 = vmatpush2.msra.mxu0 0.0
        %313 = vmatprep.subr.mxu0 0.0
        %314 = vmatpush2.msra.mxu0 0.0
        %315 = vmatprep.subr.mxu0 0.0
        %316 = vmatpush2.msra.mxu0 0.0
        %317 = vmatprep.subr.mxu0 0.0
        %318 = vmatpush2.msra.mxu0 0.0
        %319 = vmatprep.mubr.f32.mxu0 0.0
        %320 = vmatmul.mubr.f32.gmra.mxu0 %v253
        %v321 = vpop.f32.mrf.mxu0
        %v322 = vadd.f32 0.0, %v321
        %v323 = vpop.f32.mrf.mxu0
        %324 = vdwg.mxu0
        %v325 = vadd.f32 %v245, %v322
        %vm326 = vcmask 130048
        %327 = vst.msk [vmem:[#allocation2] sm:$0xff] %vm326, %v325
        // Predicated region
        $region37: #{tpu_custom_call.1} parent=31 // pred_check
          %p328 = pneg %p239
        $region38: #{tpu_custom_call.1} parent=31 // pred_check_branch
          %330 = sbr.rel (%p328) target = $region40
        $region39: #{tpu_custom_call.1} parent=31 // pred_region
          %v331 = vld [vmem:[#allocation2] sm:$0xff]
          %v332 = vld [vmem:[%s238] sm:$0x1]
          %v334 = vlaneseq
          %v335 = vshrl.u32 %v334, 7
          %v336 = vsub.s32 0, %v335
          %v337 = vrot.slane %v332, %v336
          %v339 = vadd.f32 %v331, %v337
          %340 = vst.msk [vmem:[%s218] sm:$0xff] %vm326, %v339
        $region40: #{tpu_custom_call.1} parent=31 // pred_fallthru
          _
        %s341 = sand.u32 %s119, 1
        %s342 = scalar_lea.sflag [#allocation4], %s341
        %s343 = sand.u32 %s119, 1
        %s344 = smul.addr %s343, 8
        %s345 = scalar_lea.vmem [#allocation3], %s344
        // Predicated region
        $region41: #{tpu_custom_call.1} parent=31 // pred_check
          %p346 = pneg %p129
        $region42: #{tpu_custom_call.1} parent=31 // pred_check_branch
          %348 = sbr.rel (%p346) target = $region44
        $region43: #{tpu_custom_call.1} parent=31 // pred_region
          %s350 = ssub.s32 128, 128
          %351 = vsyncadd %s342, %s350
          %s352 = smul.addr %s21, 128
          %s353 = scalar_lea.hbm %s3, %s352
          %s355 = sshll.u32 %s345, 4
          %s356 = int_to_ptr.vmem [resolvable:$true] %s355
          %358 = dma.vmem_to_hbm [thread:$0]  %s356, 128, %s353, %s342
        $region44: #{tpu_custom_call.1} parent=31 // pred_fallthru
          _
      $region32: #{tpu_custom_call.1} parent=5 // pred_fallthru
        _
      %p359 = scmp.le.s32.totalorder 2, %s12
      // Predicated region
      $region45: #{tpu_custom_call.1} parent=5 // pred_check
        %p360 = pneg %p359
      $region46: #{tpu_custom_call.1} parent=5 // pred_check_branch
        %362 = sbr.rel (%p360) target = $region48
      $region47: #{tpu_custom_call.1} parent=5 // pred_region
        %s363 = ssub.s32 %s12, 2
        // Predicated region
        $region49: #{tpu_custom_call.1} parent=47 // pred_check
          %p364 = pneg %p135
        $region50: #{tpu_custom_call.1} parent=47 // pred_check_branch
          %366 = sbr.rel (%p364) target = $region52
        $region51: #{tpu_custom_call.1} parent=47 // pred_region
          %s367 = sand.u32 %s120, 1
          %s368 = scalar_lea.sflag [#allocation4], %s367
          %s369 = sand.u32 %s120, 1
          %s370 = smul.addr %s369, 8
          %s371 = scalar_lea.vmem [#allocation3], %s370
          %372 = dma.done %s368, 128
        $region52: #{tpu_custom_call.1} parent=47 // pred_fallthru
          _
      $region48: #{tpu_custom_call.1} parent=5 // pred_fallthru
        _
    $region6: #{tpu_custom_call.1} parent=1 // loop_footer
      %s16 = sadd.s32 1, %s12
    $region7: #{tpu_custom_call.1} parent=1 // loop_footer_branch
      %11 = sbr.rel target = $region3
    $region8: #{tpu_custom_call.1} parent=1 // loop_exit
      _
    %373 = vsyncpa [#allocation4], 1
    %s374 = scalar_lea.sflag [#allocation4], 1
    %375 = vsyncpa %s374, 1

</llo_original>
